<compile_context>
chip_gen: v7x
topology: tpu7x:2x2x1
jax: 0.10.0
libtpu: 0.0.40
codegen_flags: <defaults>
</compile_context>

<pallas_src>
import functools

import jax
import jax.numpy as jnp
from jax.experimental import pallas as pl
from jax.experimental.pallas import tpu as pltpu

_LANE = 128
_VMEM_LIMIT_BYTES = 32 * 1024 * 1024  # safe on v5e/v6e/v7x; raises v5e's 16 MiB default
_A_TILE_BYTES = 2 * 1024 * 1024       # per-buffer budget for one A row tile


def _round_up(x, m):
    return ((x + m - 1) // m) * m


def _pad2d(a, shape):
    out = jnp.zeros(shape, a.dtype)
    return out.at[: a.shape[0], : a.shape[1]].set(a)


# --------------------------------------------------------------------------
# Kernels
# --------------------------------------------------------------------------
def _proj_kernel(x_ref, w_ref, o_ref):
    """out_tile = X_tile @ W  (row-tiled dense projection)."""
    o_ref[...] = jnp.dot(
        x_ref[...], w_ref[...], preferred_element_type=jnp.float32
    ).astype(o_ref.dtype)


def _sage_agg_kernel(apply_relu, has_mask, use_bf16, *refs):
    """out_tile = A_tile @ XW + X_tile @ W_r + b  (+ optional ReLU, dropout mask)."""
    if has_mask:
        a_ref, xw_ref, x_ref, wr_ref, b_ref, m_ref, o_ref = refs
    else:
        a_ref, xw_ref, x_ref, wr_ref, b_ref, o_ref = refs
        m_ref = None

    a = a_ref[...]
    xw = xw_ref[...]
    if use_bf16:
        # Optional bf16 MXU path (v6e/v7x): halves VMEM/HBM traffic of the
        # O(N^2) term; accumulation stays in f32.
        a = a.astype(jnp.bfloat16)
        xw = xw.astype(jnp.bfloat16)

    agg = jnp.dot(a, xw, preferred_element_type=jnp.float32)          # (tm, f_out)
    root = jnp.dot(x_ref[...], wr_ref[...],
                   preferred_element_type=jnp.float32)                # (tm, f_out)
    h = agg + root + b_ref[...]
    if apply_relu:
        h = jnp.maximum(h, 0.0)
    if m_ref is not None:
        h = h * m_ref[...]  # mask is pre-scaled by 1/(1-p); zeros drop
    o_ref[...] = h.astype(o_ref.dtype)


# --------------------------------------------------------------------------
# pallas_call wrappers
# --------------------------------------------------------------------------
def _compiler_params():
    return pltpu.CompilerParams(
        dimension_semantics=("parallel",),
        vmem_limit_bytes=_VMEM_LIMIT_BYTES,
    )


def _project(x, w, tm):
    """Row-tiled X @ W."""
    n_p, f_in = x.shape
    f_out = w.shape[1]
    grid = (n_p // tm,)
    cost = pl.CostEstimate(
        flops=2 * n_p * f_in * f_out,
        transcendentals=0,
        bytes_accessed=4 * (n_p * f_in + f_in * f_out + n_p * f_out),
    )
    return pl.pallas_call(
        _proj_kernel,
        out_shape=jax.ShapeDtypeStruct((n_p, f_out), x.dtype),
        grid=grid,
        in_specs=[
            pl.BlockSpec((tm, f_in), lambda i: (i, 0)),
            pl.BlockSpec((f_in, f_out), lambda i: (0, 0)),
        ],
        out_specs=pl.BlockSpec((tm, f_out), lambda i: (i, 0)),
        compiler_params=_compiler_params(),
        cost_estimate=cost,
    )(x, w)


def _sage_aggregate(a, xw, x, w_r, b, tm, *, relu, mask, use_bf16):
    """Row-tiled A @ XW + X @ W_r + b (+ optional fused ReLU / dropout mask)."""
    n_p = a.shape[0]
    f_in = x.shape[1]
    f_out = xw.shape[1]
    grid = (n_p // tm,)

    in_specs = [
        pl.BlockSpec((tm, n_p), lambda i: (i, 0)),      # A row tile (pipelined)
        pl.BlockSpec((n_p, f_out), lambda i: (0, 0)),   # XW, full (needed by every tile)
        pl.BlockSpec((tm, f_in), lambda i: (i, 0)),     # X row tile
        pl.BlockSpec((f_in, f_out), lambda i: (0, 0)),  # W_r
        pl.BlockSpec((1, f_out), lambda i: (0, 0)),     # bias
    ]
    args = [a, xw, x, w_r, b]
    if mask is not None:
        in_specs.append(pl.BlockSpec((tm, f_out), lambda i: (i, 0)))
        args.append(mask)

    kernel = functools.partial(_sage_agg_kernel, relu, mask is not None, use_bf16)
    cost = pl.CostEstimate(
        flops=2 * n_p * n_p * f_out + 2 * n_p * f_in * f_out,
        transcendentals=0,
        bytes_accessed=4 * (n_p * n_p + 2 * n_p * f_out + n_p * f_in + f_in * f_out),
    )
    return pl.pallas_call(
        kernel,
        out_shape=jax.ShapeDtypeStruct((n_p, f_out), a.dtype),
        grid=grid,
        in_specs=in_specs,
        out_specs=pl.BlockSpec((tm, f_out), lambda i: (i, 0)),
        compiler_params=_compiler_params(),
        cost_estimate=cost,
    )(*args)


# --------------------------------------------------------------------------
# Glue: normalized adjacency + full forward
# --------------------------------------------------------------------------
def _build_mean_adjacency(edge_index, n_pad, dtype):
    """Dense A with A[i, j] = 1/deg(i) for each edge j -> i (0 rows if deg==0)."""
    # TODO(synk): for realistically sparse graphs replace this dense O(N^2)
    # adjacency (+ dense matmul) with a CSR scalar-prefetch gather path.
    src = edge_index[0]
    dst = edge_index[1]
    ones = jnp.ones(src.shape, dtype=dtype)
    A = jnp.zeros((n_pad, n_pad), dtype=dtype).at[dst, src].add(ones)
    deg = jnp.zeros((n_pad,), dtype=dtype).at[dst].add(ones)
    deg = jnp.maximum(deg, 1.0)
    return A / deg[:, None]


def graphsage_forward(x, edge_index, params, dropout_p, key,
                      edge_weight=None, use_bf16_matmul=False):
    """Fused GraphSage forward on TPU via row-tiled Pallas kernels."""
    del edge_weight  # PyG SAGEConv does not use edge_weight; kept for API parity.
    n, in_c = x.shape
    hidden_c = params["w1_l"].shape[1]
    out_c = params["w2_l"].shape[1]
    dtype = x.dtype

    # ---- pad to TPU-friendly shapes -------------------------------------
    in_p = _round_up(in_c, _LANE)
    hid_p = _round_up(hidden_c, _LANE)
    out_p = _round_up(out_c, _LANE)

    n8 = _round_up(n, 8)
    tm_cap = max(8, (_A_TILE_BYTES // (4 * n8)) // 8 * 8)  # A tile <= budget
    tm = max(8, min(512, tm_cap, n8))
    n_p = _round_up(n, tm)

    x_p = _pad2d(x, (n_p, in_p))
    w1l = _pad2d(params["w1_l"], (in_p, hid_p))
    w1r = _pad2d(params["w1_r"], (in_p, hid_p))
    b1 = _pad2d(params["b1"].reshape(1, -1), (1, hid_p))
    w2l = _pad2d(params["w2_l"], (hid_p, out_p))
    w2r = _pad2d(params["w2_r"], (hid_p, out_p))
    b2 = _pad2d(params["b2"].reshape(1, -1), (1, out_p))

    a_norm = _build_mean_adjacency(edge_index, n_p, dtype)

    # Dropout keep-mask (inverted scaling), generated outside the kernel so
    # the kernel body stays portable (no TPU-only PRNG primitives).
    if dropout_p > 0.0:
        keep = jax.random.bernoulli(key, 1.0 - float(dropout_p), (n_p, hid_p))
        mask = keep.astype(dtype) * (1.0 / (1.0 - float(dropout_p)))
    else:
        mask = None

    # ---- layer 1: SAGEConv(in -> hidden) + ReLU + dropout ----------------
    xw1 = _project(x_p, w1l, tm)                                   # X @ W1_l
    h1 = _sage_aggregate(a_norm, xw1, x_p, w1r, b1, tm,
                         relu=True, mask=mask, use_bf16=use_bf16_matmul)

    # ---- layer 2: SAGEConv(hidden -> out) --------------------------------
    hw2 = _project(h1, w2l, tm)                                    # h1 @ W2_l
    out = _sage_aggregate(a_norm, hw2, h1, w2r, b2, tm,
                          relu=False, mask=None, use_bf16=use_bf16_matmul)

    return out[:n, :out_c]


def init_params(key, in_channels, hidden_channels, out_channels,
                dtype=jnp.float32):
    """Deterministic synthetic parameter init (Glorot-ish), matching SAGEConv shapes."""
    ks = jax.random.split(key, 4)

    def glorot(k, shape):
        fan_in, fan_out = shape
        lim = (6.0 / (fan_in + fan_out)) ** 0.5
        return jax.random.uniform(k, shape, dtype, -lim, lim)

    return {
        "w1_l": glorot(ks[0], (in_channels, hidden_channels)),   # lin_l.weight^T
        "w1_r": glorot(ks[1], (in_channels, hidden_channels)),   # lin_r.weight^T
        "b1": jnp.zeros((1, hidden_channels), dtype),            # lin_l.bias
        "w2_l": glorot(ks[2], (hidden_channels, out_channels)),
        "w2_r": glorot(ks[3], (hidden_channels, out_channels)),
        "b2": jnp.zeros((1, out_channels), dtype),
    }


if __name__ == "__main__":
    key = jax.random.PRNGKey(0)
    k_x, k_e, k_p, k_d = jax.random.split(key, 4)

    num_nodes = 16
    num_edges = 64
    in_channels, hidden_channels, out_channels = 32, 32, 32
    dropout_p = 0.5

    x = jax.random.normal(k_x, (num_nodes, in_channels), dtype=jnp.float32)
    edge_index = jax.random.randint(k_e, (2, num_edges), 0, num_nodes,
                                    dtype=jnp.int32)
    params = init_params(k_p, in_channels, hidden_channels, out_channels)

    out = graphsage_forward(x, edge_index, params, dropout_p, key=k_d)
    out = jax.block_until_ready(out)
    assert out.shape == (num_nodes, out_channels)
    assert jnp.all(jnp.isfinite(out))
    print("KERNEL_OK")
</pallas_src>

<mosaic_0001>
module attributes {stable_mosaic.version = 11 : i64} {
  func.func @_proj_kernel(%arg0: i32, %arg1: memref<16x128xf32, #tpu.memory_space<vmem>>, %arg2: memref<128x128xf32, #tpu.memory_space<vmem>>, %arg3: memref<16x128xf32, #tpu.memory_space<vmem>>) attributes {dimension_semantics = [#tpu.dimension_semantics<parallel>], iteration_bounds = array<i64: 1>, scalar_prefetch = 0 : i64, scratch_operands = 0 : i64, tpu.core_type = #tpu.core_type<tc>, window_params = [{transform_indices = @transform_0, window_bounds = array<i64: 16, 128>}, {pipeline_mode = #tpu.pipeline_mode<synchronous>, transform_indices = @transform_1, window_bounds = array<i64: 128, 128>}, {transform_indices = @transform_2, window_bounds = array<i64: 16, 128>}]} {
    %c0 = arith.constant 0 : index
    %c0_0 = arith.constant 0 : index
    %0 = vector.load %arg1[%c0, %c0_0] : memref<16x128xf32, #tpu.memory_space<vmem>>, vector<16x128xf32>
    %c0_1 = arith.constant 0 : index
    %c0_2 = arith.constant 0 : index
    %1 = vector.load %arg2[%c0_1, %c0_2] : memref<128x128xf32, #tpu.memory_space<vmem>>, vector<128x128xf32>
    %cst = arith.constant dense<0.000000e+00> : vector<16x128xf32>
    %2 = tpu.matmul %0, %1, %cst {dimension_numbers = #tpu.dot_dimension_numbers<[1], [0], [0], [1], [0, 0, 1, 1], [], []>} : vector<16x128xf32>, vector<128x128xf32>, vector<16x128xf32> -> vector<16x128xf32>
    %c0_3 = arith.constant 0 : index
    %c0_4 = arith.constant 0 : index
    %3 = vector.load %arg3[%c0_3, %c0_4] : memref<16x128xf32, #tpu.memory_space<vmem>>, vector<16x128xf32>
    tpu.vector_store %arg3[%c0_3, %c0_4], %2 {strides = array<i32>} : memref<16x128xf32, #tpu.memory_space<vmem>>, vector<16x128xf32>,
    return
  }
  func.func @transform_0(%arg0: i32) -> (i32, i32) {
    %c0_i32 = arith.constant 0 : i32
    %c0_i32_0 = arith.constant 0 : i32
    return %arg0, %c0_i32 : i32, i32
  }
  func.func @transform_1(%arg0: i32) -> (i32, i32) {
    %c0_i32 = arith.constant 0 : i32
    %c0_i32_0 = arith.constant 0 : i32
    %c0_i32_1 = arith.constant 0 : i32
    return %c0_i32, %c0_i32_0 : i32, i32
  }
  func.func @transform_2(%arg0: i32) -> (i32, i32) {
    %c0_i32 = arith.constant 0 : i32
    %c0_i32_0 = arith.constant 0 : i32
    return %arg0, %c0_i32 : i32, i32
  }
}

</mosaic_0001>

<llo_original>
// kernel: tpu_custom_call.1
$region0: #{tpu_custom_call.1}
  #allocation0 [shape = 'u32[]', space=smem, size = 0x4, offset = 0x4, fixed_abs, tag = 'smem constant byte address 0x4 - core index']
  #allocation1 [shape = 'u32[144,128]{1,0:T(1,128)}', space=vmem, size = 0x12000, scoped, tag = 'internal scratch']
  %s0 = inlined_call_operand.hbm [shape: f32[16,128], index: 0, kind: input, shape index: {}]
  %s1 = inlined_call_operand.hbm [shape: f32[128,128], index: 1, kind: input, shape index: {}]
  %s2 = inlined_call_operand.hbm [shape: f32[16,128], index: 2, kind: output, shape index: {}]
  %s3 = sld [smem:[#allocation0]]
  $region26: #{tpu_custom_call.1} parent=0
    _
  %s5 = ssub.s32 1, %s3
  %s6 = scalar_select 0, %s5, %s3
  $region1: #{tpu_custom_call.1} parent=0
    #allocation2 [shape = 'u8[8192]{0}', space=vmem, size = 0x2000, scoped, tag = 'input window, operand 0, single buffered']
    #allocation3 [shape = 's32[1]{0}', space=sflag, size = 0x4, scoped, tag = 'scoped memory for tpu_custom_call.1']
    #allocation4 [shape = 's32[1]{0}', space=sflag, size = 0x4, scoped, tag = 'scoped memory for tpu_custom_call.1']
    #allocation5 [shape = 'u8[65536]{0}', space=vmem, size = 0x10000, scoped, tag = 'input window, operand 1, single buffered']
    #allocation6 [shape = 's32[1]{0}', space=sflag, size = 0x4, scoped, tag = 'scoped memory for tpu_custom_call.1']
    #allocation7 [shape = 'u8[8192]{0}', space=vmem, size = 0x2000, scoped, tag = 'output window, operand 0, single buffered']
    %7 = vsyncpa [#allocation3], 0
    %8 = vsyncpa [#allocation6], 0
    %9 = vsyncpa [#allocation4], 0
    // Predicated region
    $region2: #{tpu_custom_call.1} parent=1 // pred_check
      _
    $region3: #{tpu_custom_call.1} parent=1 // pred_check_branch
      %11 = sbr.rel (0) target = $region5
    $region4: #{tpu_custom_call.1} parent=1 // pred_region
      %s13 = ssub.s32 256, 256
      %14 = vsyncadd [#allocation3], %s13
      %s15 = sshll.u32 [#allocation2], 4
      %s16 = int_to_ptr.vmem [resolvable:$true] %s15
      %21 = dma.hbm_to_vmem [thread:$0]  %s0, 256, %s16, [#allocation3], 128, 128, 8
    $region5: #{tpu_custom_call.1} parent=1 // pred_fallthru
      _
    // Predicated region
    $region6: #{tpu_custom_call.1} parent=1 // pred_check
      _
    $region7: #{tpu_custom_call.1} parent=1 // pred_check_branch
      %23 = sbr.rel (0) target = $region9
    $region8: #{tpu_custom_call.1} parent=1 // pred_region
      %s25 = ssub.s32 2048, 2048
      %26 = vsyncadd [#allocation6], %s25
      %s27 = sshll.u32 [#allocation5], 4
      %s28 = int_to_ptr.vmem [resolvable:$true] %s27
      %33 = dma.hbm_to_vmem [thread:$0]  %s1, 2048, %s28, [#allocation6], 128, 128, 8
    $region9: #{tpu_custom_call.1} parent=1 // pred_fallthru
      _
    // Predicated region
    $region10: #{tpu_custom_call.1} parent=1 // pred_check
      _
    $region11: #{tpu_custom_call.1} parent=1 // pred_check_branch
      %35 = sbr.rel (0) target = $region13
    $region12: #{tpu_custom_call.1} parent=1 // pred_region
      %36 = dma.done [#allocation3], 256
    $region13: #{tpu_custom_call.1} parent=1 // pred_fallthru
      _
    // Predicated region
    $region14: #{tpu_custom_call.1} parent=1 // pred_check
      _
    $region15: #{tpu_custom_call.1} parent=1 // pred_check_branch
      %38 = sbr.rel (0) target = $region17
    $region16: #{tpu_custom_call.1} parent=1 // pred_region
      %39 = dma.done [#allocation6], 2048
    $region17: #{tpu_custom_call.1} parent=1 // pred_fallthru
      _
    %v40 = vld [vmem:[#allocation2] sm:$0xff]
    %v41 = vld [vmem:[#allocation2 + $0x8] sm:$0xff]
    %v42 = vld [vmem:[#allocation5] sm:$0xff]
    %v43 = vld [vmem:[#allocation5 + $0x8] sm:$0xff]
    %v44 = vld [vmem:[#allocation5 + $0x10] sm:$0xff]
    %v45 = vld [vmem:[#allocation5 + $0x18] sm:$0xff]
    %v46 = vld [vmem:[#allocation5 + $0x20] sm:$0xff]
    %v47 = vld [vmem:[#allocation5 + $0x28] sm:$0xff]
    %v48 = vld [vmem:[#allocation5 + $0x30] sm:$0xff]
    %v49 = vld [vmem:[#allocation5 + $0x38] sm:$0xff]
    %v50 = vld [vmem:[#allocation5 + $0x40] sm:$0xff]
    %v51 = vld [vmem:[#allocation5 + $0x48] sm:$0xff]
    %v52 = vld [vmem:[#allocation5 + $0x50] sm:$0xff]
    %v53 = vld [vmem:[#allocation5 + $0x58] sm:$0xff]
    %v54 = vld [vmem:[#allocation5 + $0x60] sm:$0xff]
    %v55 = vld [vmem:[#allocation5 + $0x68] sm:$0xff]
    %v56 = vld [vmem:[#allocation5 + $0x70] sm:$0xff]
    %v57 = vld [vmem:[#allocation5 + $0x78] sm:$0xff]
    %58 = vmatprep.subr.mxu0 0.0
    %59 = vmatpush1.msra.mxu0 %v42
    %60 = vmatprep.subr.mxu0 0.0
    %61 = vmatpush1.msra.mxu0 %v43
    %62 = vmatprep.subr.mxu0 0.0
    %63 = vmatpush1.msra.mxu0 %v44
    %64 = vmatprep.subr.mxu0 0.0
    %65 = vmatpush1.msra.mxu0 %v45
    %66 = vmatprep.subr.mxu0 0.0
    %67 = vmatpush1.msra.mxu0 %v46
    %68 = vmatprep.subr.mxu0 0.0
    %69 = vmatpush1.msra.mxu0 %v47
    %70 = vmatprep.subr.mxu0 0.0
    %71 = vmatpush1.msra.mxu0 %v48
    %72 = vmatprep.subr.mxu0 0.0
    %73 = vmatpush1.msra.mxu0 %v49
    %74 = vmatprep.subr.mxu0 0.0
    %75 = vmatpush1.msra.mxu0 %v50
    %76 = vmatprep.subr.mxu0 0.0
    %77 = vmatpush1.msra.mxu0 %v51
    %78 = vmatprep.subr.mxu0 0.0
    %79 = vmatpush1.msra.mxu0 %v52
    %80 = vmatprep.subr.mxu0 0.0
    %81 = vmatpush1.msra.mxu0 %v53
    %82 = vmatprep.subr.mxu0 0.0
    %83 = vmatpush1.msra.mxu0 %v54
    %84 = vmatprep.subr.mxu0 0.0
    %85 = vmatpush1.msra.mxu0 %v55
    %86 = vmatprep.subr.mxu0 0.0
    %87 = vmatpush1.msra.mxu0 %v56
    %88 = vmatprep.subr.mxu0 0.0
    %89 = vmatpush1.msra.mxu0 %v57
    %90 = vmatprep.subr.mxu0 0.0
    %91 = vmatpush1.msra.mxu0 0.0
    %92 = vmatprep.subr.mxu0 0.0
    %93 = vmatpush1.msra.mxu0 0.0
    %94 = vmatprep.subr.mxu0 0.0
    %95 = vmatpush1.msra.mxu0 0.0
    %96 = vmatprep.subr.mxu0 0.0
    %97 = vmatpush1.msra.mxu0 0.0
    %98 = vmatprep.subr.mxu0 0.0
    %99 = vmatpush1.msra.mxu0 0.0
    %100 = vmatprep.subr.mxu0 0.0
    %101 = vmatpush1.msra.mxu0 0.0
    %102 = vmatprep.subr.mxu0 0.0
    %103 = vmatpush1.msra.mxu0 0.0
    %104 = vmatprep.subr.mxu0 0.0
    %105 = vmatpush1.msra.mxu0 0.0
    %106 = vmatprep.subr.mxu0 0.0
    %107 = vmatpush1.msra.mxu0 0.0
    %108 = vmatprep.subr.mxu0 0.0
    %109 = vmatpush1.msra.mxu0 0.0
    %110 = vmatprep.subr.mxu0 0.0
    %111 = vmatpush1.msra.mxu0 0.0
    %112 = vmatprep.subr.mxu0 0.0
    %113 = vmatpush1.msra.mxu0 0.0
    %114 = vmatprep.subr.mxu0 0.0
    %115 = vmatpush1.msra.mxu0 0.0
    %116 = vmatprep.subr.mxu0 0.0
    %117 = vmatpush1.msra.mxu0 0.0
    %118 = vmatprep.subr.mxu0 0.0
    %119 = vmatpush1.msra.mxu0 0.0
    %120 = vmatprep.subr.mxu0 0.0
    %121 = vmatpush1.msra.mxu0 0.0
    %122 = vmatprep.mubr.f32.mxu0 0.0
    %123 = vmatmul.mubr.f32.gmra.mrb[0].mxu0 %v40
    %v124 = vpop.f32.mrb[0].mxu0
    %v125 = vadd.f32 0.0, %v124
    %v126 = vpop.f32.mrb[0].mxu0
    %127 = vmatprep.mubr.f32.mxu0 0.0
    %128 = vmatmul.mubr.f32.gmra.mrb[0].mxu0 %v41
    %v129 = vpop.f32.mrb[0].mxu0
    %v130 = vadd.f32 0.0, %v129
    %v131 = vpop.f32.mrb[0].mxu0
    %132 = vdwg.mxu0
    %133 = vst [vmem:[#allocation7] sm:$0xff] %v125
    %134 = vst [vmem:[#allocation7 + $0x8] sm:$0xff] %v130
    // Predicated region
    $region18: #{tpu_custom_call.1} parent=1 // pred_check
      _
    $region19: #{tpu_custom_call.1} parent=1 // pred_check_branch
      %136 = sbr.rel (0) target = $region21
    $region20: #{tpu_custom_call.1} parent=1 // pred_region
      %s138 = ssub.s32 256, 256
      %139 = vsyncadd [#allocation4], %s138
      %s140 = sshll.u32 [#allocation7], 4
      %s141 = int_to_ptr.vmem [resolvable:$true] %s140
      %146 = dma.vmem_to_hbm [thread:$0]  %s141, 256, %s2, [#allocation4], 128, 128, 8
    $region21: #{tpu_custom_call.1} parent=1 // pred_fallthru
      _
    // Predicated region
    $region22: #{tpu_custom_call.1} parent=1 // pred_check
      _
    $region23: #{tpu_custom_call.1} parent=1 // pred_check_branch
      %148 = sbr.rel (0) target = $region25
    $region24: #{tpu_custom_call.1} parent=1 // pred_region
      %149 = dma.done [#allocation4], 256
    $region25: #{tpu_custom_call.1} parent=1 // pred_fallthru
      _
    %150 = vsyncpa [#allocation3], 1
    %151 = vsyncpa [#allocation6], 1
    %152 = vsyncpa [#allocation4], 1

</llo_original>
